<compile_context>
chip_gen: v7x
topology: tpu7x:2x2x1
jax: 0.10.0
libtpu: 0.0.40
codegen_flags: <defaults>
</compile_context>

<pallas_src>
import numpy as np
import jax
import jax.numpy as jnp
from jax.experimental import pallas as pl
from jax.experimental.pallas import tpu as pltpu

# Small config consistent with the module (PIL image_size is (width, height)).
IMAGE_SIZE = (80, 400)   # (width, height) -> arrays are (400, 80)
FONT_SIZE = 34
TEXT_COLOR = (0, 0, 0)
BG_COLOR = (255, 255, 255)

_LANES = 128
# Per-channel affine constants for the composite:  img = base + mask * diff
_BASE = tuple(float(b) / 255.0 for b in BG_COLOR)
_DIFF = tuple((float(t) - float(b)) / 255.0 for t, b in zip(TEXT_COLOR, BG_COLOR))


# ----------------------------------------------------------------------------
# Host-side glue: deterministic synthetic "font" rasterization (mask building)
# ----------------------------------------------------------------------------
# TODO(synk): PIL ImageFont/ImageDraw glyph rendering has no Pallas equivalent;
# glyph bitmaps are synthesized deterministically from the character code.
def _char_size(char, font_size):
    # stand-in for draw.textsize(char, font=font)
    return max(1, font_size // 2), font_size  # (w, h)


def _glyph_bitmap(char, w, h):
    if char == " ":
        return np.zeros((h, w), np.float32)
    code = ord(char)
    yy, xx = np.meshgrid(np.arange(h), np.arange(w), indexing="ij")
    return (((yy * 7 + xx * 3 + code) % 5) < 3).astype(np.float32)


def rasterize_mask(text_batch, image_size, font_size):
    """Reproduces the module's character layout logic.

    Returns (B, H, W) int8 text-coverage mask with values in {0, 1} (binary
    coverage; shipped narrow so the device upload / input DMA is 4x smaller
    than float32).
    """
    width, height = image_size
    masks = np.zeros((len(text_batch), height, width), np.float32)
    for i, text in enumerate(text_batch):
        parts = [text[:4], " ", text[4:11]] if len(text) >= 11 else [text]
        y_pos = 20
        for part in parts:
            for char in part:
                w, h = _char_size(char, font_size)
                x_pos = 5 + (width - 10 - w) // 2
                glyph = _glyph_bitmap(char, w, h)
                y0, y1 = max(y_pos, 0), min(y_pos + h, height)
                x0, x1 = max(x_pos, 0), min(x_pos + w, width)
                if y1 > y0 and x1 > x0:
                    gy0, gx0 = y0 - y_pos, x0 - x_pos
                    masks[i, y0:y1, x0:x1] = np.maximum(
                        masks[i, y0:y1, x0:x1],
                        glyph[gy0 : gy0 + (y1 - y0), gx0 : gx0 + (x1 - x0)],
                    )
                y_pos += h + (25 if part == text[:4] and char == part[-1] else 10)
    return masks.astype(np.int8)


# ----------------------------------------------------------------------------
# Pallas kernel: cast + composite + normalize + channel broadcast, NCHW output
# ----------------------------------------------------------------------------
def compose_kernel(mask_ref, out_ref):
    # mask_ref: VMEM int8    (bb, rows, 128) -- lane-dense H*W coverage {0,1}
    # out_ref:  VMEM float32 (bb, 3, rows, 128) -- all 3 channels, bb images
    m = mask_ref[...].astype(jnp.float32)          # free cast, VALU has slack
    computed = {}                                  # trace-time dedup: grayscale
    for c in range(3):                             # colors -> one compute, 3 stores
        key = (_BASE[c], _DIFF[c])
        if key not in computed:
            computed[key] = _BASE[c] + m * _DIFF[c]
        out_ref[:, c, :, :] = computed[key]


def generate_images(mask_i8, images_per_step=1):
    """mask_i8: (B, H, W) int8 {0,1} coverage mask -> (B, 3, H, W) float32.

    images_per_step: images per grid step.  Keep >= num_cores grid steps on
    v7x; raise it on single-TC chips (v5e/v6e) to amortize per-step overhead.
    """
    B, H, W = mask_i8.shape
    hw = H * W
    assert hw % _LANES == 0, "H*W must be a multiple of 128 for lane-dense layout"
    rows = hw // _LANES                      # 400*80 = 32000 -> 250 rows x 128 lanes
    bb = images_per_step
    assert B % bb == 0, "batch must be divisible by images_per_step"
    mask_flat = mask_i8.reshape(B, rows, _LANES)

    def build_call(dim_semantics):
        return pl.pallas_call(
            compose_kernel,
            out_shape=jax.ShapeDtypeStruct((B, 3, rows, _LANES), jnp.float32),
            grid=(B // bb,),
            in_specs=[
                pl.BlockSpec((bb, rows, _LANES), lambda b: (b, 0, 0)),
            ],
            out_specs=pl.BlockSpec((bb, 3, rows, _LANES), lambda b: (b, 0, 0, 0)),
            compiler_params=pltpu.CompilerParams(
                dimension_semantics=dim_semantics,
            ),
        )

    try:
        # CORE_PARALLEL is the semantics that actually splits grid steps across
        # v7x's two TensorCores (plain "parallel" has near-zero codegen impact).
        out_flat = jax.block_until_ready(
            build_call((pltpu.CORE_PARALLEL,))(mask_flat)
        )
    except Exception:
        # Fallback for chips / toolchains that reject CORE_PARALLEL here.
        out_flat = jax.block_until_ready(build_call(("parallel",))(mask_flat))

    # Contiguous reshape back to NCHW (B, 3, H, W) -- free in the wrapper.
    return out_flat.reshape(B, 3, H, W)


if __name__ == "__main__":
    # Deterministic example "text_batch" built from PRNGKey(0).
    key = jax.random.PRNGKey(0)
    alphabet = "ABCDEFGHIJKLMNOPQRSTUVWXYZ0123456789"
    idx = np.asarray(jax.random.randint(key, (2, 11), 0, len(alphabet)))
    text_batch = ["".join(alphabet[j] for j in row) for row in idx]

    mask_np = rasterize_mask(text_batch, IMAGE_SIZE, FONT_SIZE)  # (B, H, W) int8
    mask = jnp.asarray(mask_np)

    out = generate_images(mask)
    out = jax.block_until_ready(out)

    # Shape/dtype match the torch module: (B, 3, height, width) float32.
    B = len(text_batch)
    width, height = IMAGE_SIZE
    assert out.shape == (B, 3, height, width), out.shape
    assert out.dtype == jnp.float32

    # Pure-numpy reference check: (m*text + (1-m)*bg) / 255.
    tc = np.asarray(TEXT_COLOR, np.float32)[None, :, None, None]
    bg = np.asarray(BG_COLOR, np.float32)[None, :, None, None]
    m = mask_np.astype(np.float32)[:, None, :, :]
    ref = (m * tc + (1.0 - m) * bg) / 255.0
    np.testing.assert_allclose(np.asarray(out), ref, rtol=1e-6, atol=1e-6)

    print("KERNEL_OK")
</pallas_src>

<mosaic_0001>
module attributes {stable_mosaic.version = 11 : i64} {
  func.func @compose_kernel(%arg0: i32, %arg1: memref<1x250x128xi8, #tpu.memory_space<vmem>>, %arg2: memref<1x3x250x128xf32, #tpu.memory_space<vmem>>) attributes {dimension_semantics = [#tpu.dimension_semantics<core_parallel>], iteration_bounds = array<i64: 2>, scalar_prefetch = 0 : i64, scratch_operands = 0 : i64, tpu.core_type = #tpu.core_type<tc>, window_params = [{transform_indices = @transform_0, window_bounds = array<i64: 1, 250, 128>}, {transform_indices = @transform_1, window_bounds = array<i64: 1, 3, 250, 128>}]} {
    %c0 = arith.constant 0 : index
    %c0_0 = arith.constant 0 : index
    %c0_1 = arith.constant 0 : index
    %0 = vector.load %arg1[%c0, %c0_0, %c0_1] : memref<1x250x128xi8, #tpu.memory_space<vmem>>, vector<1x250x128xi8>
    %1 = arith.sitofp %0 : vector<1x250x128xi8> to vector<1x250x128xf32>
    %cst = arith.constant -1.000000e+00 : f32
    %2 = vector.broadcast %cst : f32 to vector<1x250x128xf32>
    %3 = arith.mulf %1, %2 : vector<1x250x128xf32>
    %cst_2 = arith.constant 1.000000e+00 : f32
    %4 = vector.broadcast %cst_2 : f32 to vector<1x250x128xf32>
    %5 = arith.addf %4, %3 : vector<1x250x128xf32>
    %c0_3 = arith.constant 0 : index
    %c0_4 = arith.constant 0 : index
    %c0_5 = arith.constant 0 : index
    %c0_6 = arith.constant 0 : index
    %6 = vector.load %arg2[%c0_3, %c0_4, %c0_5, %c0_6] : memref<1x3x250x128xf32, #tpu.memory_space<vmem>>, vector<1x1x250x128xf32>
    %7 = vector.shape_cast %6 : vector<1x1x250x128xf32> to vector<1x250x128xf32>
    %8 = vector.shape_cast %5 : vector<1x250x128xf32> to vector<1x1x250x128xf32>
    tpu.vector_store %arg2[%c0_3, %c0_4, %c0_5, %c0_6], %8 {strides = array<i32>} : memref<1x3x250x128xf32, #tpu.memory_space<vmem>>, vector<1x1x250x128xf32>,
    %c0_7 = arith.constant 0 : index
    %c1 = arith.constant 1 : index
    %c0_8 = arith.constant 0 : index
    %c0_9 = arith.constant 0 : index
    %9 = vector.load %arg2[%c0_7, %c1, %c0_8, %c0_9] : memref<1x3x250x128xf32, #tpu.memory_space<vmem>>, vector<1x1x250x128xf32>
    %10 = vector.shape_cast %9 : vector<1x1x250x128xf32> to vector<1x250x128xf32>
    %11 = vector.shape_cast %5 : vector<1x250x128xf32> to vector<1x1x250x128xf32>
    tpu.vector_store %arg2[%c0_7, %c1, %c0_8, %c0_9], %11 {strides = array<i32>} : memref<1x3x250x128xf32, #tpu.memory_space<vmem>>, vector<1x1x250x128xf32>,
    %c0_10 = arith.constant 0 : index
    %c2 = arith.constant 2 : index
    %c0_11 = arith.constant 0 : index
    %c0_12 = arith.constant 0 : index
    %12 = vector.load %arg2[%c0_10, %c2, %c0_11, %c0_12] : memref<1x3x250x128xf32, #tpu.memory_space<vmem>>, vector<1x1x250x128xf32>
    %13 = vector.shape_cast %12 : vector<1x1x250x128xf32> to vector<1x250x128xf32>
    %14 = vector.shape_cast %5 : vector<1x250x128xf32> to vector<1x1x250x128xf32>
    tpu.vector_store %arg2[%c0_10, %c2, %c0_11, %c0_12], %14 {strides = array<i32>} : memref<1x3x250x128xf32, #tpu.memory_space<vmem>>, vector<1x1x250x128xf32>,
    return
  }
  func.func @transform_0(%arg0: i32) -> (i32, i32, i32) {
    %c0_i32 = arith.constant 0 : i32
    %c0_i32_0 = arith.constant 0 : i32
    %c0_i32_1 = arith.constant 0 : i32
    return %arg0, %c0_i32, %c0_i32_0 : i32, i32, i32
  }
  func.func @transform_1(%arg0: i32) -> (i32, i32, i32, i32) {
    %c0_i32 = arith.constant 0 : i32
    %c0_i32_0 = arith.constant 0 : i32
    %c0_i32_1 = arith.constant 0 : i32
    %c0_i32_2 = arith.constant 0 : i32
    return %arg0, %c0_i32, %c0_i32_0, %c0_i32_1 : i32, i32, i32, i32
  }
}

module attributes {stable_mosaic.version = 11 : i64} {
  func.func @compose_kernel(%arg0: i32, %arg1: memref<1x250x128xi8, #tpu.memory_space<vmem>>, %arg2: memref<1x3x250x128xf32, #tpu.memory_space<vmem>>) attributes {dimension_semantics = [#tpu.dimension_semantics<parallel>], iteration_bounds = array<i64: 2>, scalar_prefetch = 0 : i64, scratch_operands = 0 : i64, tpu.core_type = #tpu.core_type<tc>, window_params = [{transform_indices = @transform_0, window_bounds = array<i64: 1, 250, 128>}, {transform_indices = @transform_1, window_bounds = array<i64: 1, 3, 250, 128>}]} {
    %c0 = arith.constant 0 : index
    %c0_0 = arith.constant 0 : index
    %c0_1 = arith.constant 0 : index
    %0 = vector.load %arg1[%c0, %c0_0, %c0_1] : memref<1x250x128xi8, #tpu.memory_space<vmem>>, vector<1x250x128xi8>
    %1 = arith.sitofp %0 : vector<1x250x128xi8> to vector<1x250x128xf32>
    %cst = arith.constant -1.000000e+00 : f32
    %2 = vector.broadcast %cst : f32 to vector<1x250x128xf32>
    %3 = arith.mulf %1, %2 : vector<1x250x128xf32>
    %cst_2 = arith.constant 1.000000e+00 : f32
    %4 = vector.broadcast %cst_2 : f32 to vector<1x250x128xf32>
    %5 = arith.addf %4, %3 : vector<1x250x128xf32>
    %c0_3 = arith.constant 0 : index
    %c0_4 = arith.constant 0 : index
    %c0_5 = arith.constant 0 : index
    %c0_6 = arith.constant 0 : index
    %6 = vector.load %arg2[%c0_3, %c0_4, %c0_5, %c0_6] : memref<1x3x250x128xf32, #tpu.memory_space<vmem>>, vector<1x1x250x128xf32>
    %7 = vector.shape_cast %6 : vector<1x1x250x128xf32> to vector<1x250x128xf32>
    %8 = vector.shape_cast %5 : vector<1x250x128xf32> to vector<1x1x250x128xf32>
    tpu.vector_store %arg2[%c0_3, %c0_4, %c0_5, %c0_6], %8 {strides = array<i32>} : memref<1x3x250x128xf32, #tpu.memory_space<vmem>>, vector<1x1x250x128xf32>,
    %c0_7 = arith.constant 0 : index
    %c1 = arith.constant 1 : index
    %c0_8 = arith.constant 0 : index
    %c0_9 = arith.constant 0 : index
    %9 = vector.load %arg2[%c0_7, %c1, %c0_8, %c0_9] : memref<1x3x250x128xf32, #tpu.memory_space<vmem>>, vector<1x1x250x128xf32>
    %10 = vector.shape_cast %9 : vector<1x1x250x128xf32> to vector<1x250x128xf32>
    %11 = vector.shape_cast %5 : vector<1x250x128xf32> to vector<1x1x250x128xf32>
    tpu.vector_store %arg2[%c0_7, %c1, %c0_8, %c0_9], %11 {strides = array<i32>} : memref<1x3x250x128xf32, #tpu.memory_space<vmem>>, vector<1x1x250x128xf32>,
    %c0_10 = arith.constant 0 : index
    %c2 = arith.constant 2 : index
    %c0_11 = arith.constant 0 : index
    %c0_12 = arith.constant 0 : index
    %12 = vector.load %arg2[%c0_10, %c2, %c0_11, %c0_12] : memref<1x3x250x128xf32, #tpu.memory_space<vmem>>, vector<1x1x250x128xf32>
    %13 = vector.shape_cast %12 : vector<1x1x250x128xf32> to vector<1x250x128xf32>
    %14 = vector.shape_cast %5 : vector<1x250x128xf32> to vector<1x1x250x128xf32>
    tpu.vector_store %arg2[%c0_10, %c2, %c0_11, %c0_12], %14 {strides = array<i32>} : memref<1x3x250x128xf32, #tpu.memory_space<vmem>>, vector<1x1x250x128xf32>,
    return
  }
  func.func @transform_0(%arg0: i32) -> (i32, i32, i32) {
    %c0_i32 = arith.constant 0 : i32
    %c0_i32_0 = arith.constant 0 : i32
    %c0_i32_1 = arith.constant 0 : i32
    return %arg0, %c0_i32, %c0_i32_0 : i32, i32, i32
  }
  func.func @transform_1(%arg0: i32) -> (i32, i32, i32, i32) {
    %c0_i32 = arith.constant 0 : i32
    %c0_i32_0 = arith.constant 0 : i32
    %c0_i32_1 = arith.constant 0 : i32
    %c0_i32_2 = arith.constant 0 : i32
    return %arg0, %c0_i32, %c0_i32_0, %c0_i32_1 : i32, i32, i32, i32
  }
}

</mosaic_0001>

<llo_original>
// kernel: tpu_custom_call.1
$region0: #{tpu_custom_call.1}
  #allocation0 [shape = 'u32[]', space=smem, size = 0x4, offset = 0x4, fixed_abs, tag = 'smem constant byte address 0x4 - core index']
  #allocation1 [shape = 'u32[144,128]{1,0:T(1,128)}', space=vmem, size = 0x12000, scoped, tag = 'internal scratch']
  %s0 = inlined_call_operand.hbm [shape: s8[2,250,128], index: 0, kind: input, shape index: {}]
  %s1 = inlined_call_operand.vmem [shape: f32[2,3,250,128], index: 1, kind: output, shape index: {}]
  %s2 = sld [smem:[#allocation0]]
  $region41: #{tpu_custom_call.1} parent=0
    _
  %s4 = ssub.s32 1, %s2
  %s5 = scalar_select 0, %s4, %s2
  $region1: #{tpu_custom_call.1} parent=0
    #allocation2 [shape = 'u8[65536]{0}', space=vmem, size = 0x10000, scoped, tag = 'input window, operand 0']
    #allocation3 [shape = 's32[2]{0}', space=sflag, size = 0x8, scoped, tag = 'scoped memory for tpu_custom_call.1']
    %6 = vsyncpa [#allocation3], 0
    %s7 = scalar_lea.sflag [#allocation3], 1
    %8 = vsyncpa %s7, 0
    loop: start=0, step=1, limit=4
    $region2: #{tpu_custom_call.1} parent=1 // loop_pre_header
      _
    $region3: #{tpu_custom_call.1} parent=1 // loop_header
      %s10 = sphi 0, %s14
      %p11 = scmp.ge.s32.totalorder %s10, 4
      %s20 = sphi 0, %s22
      %s23 = sphi 0, %s20
      %s24 = sphi 0, %s23
      %s40 = sphi 0, %s24
      %s46 = sphi 0, %s48
      %s49 = sphi 0, %s46
      %s50 = sphi 0, %s49
      %s66 = sphi 0, %s50
    $region4: #{tpu_custom_call.1} parent=1 // loop_header_branch
      %13 = sbr.rel (%p11) target = $region8
    $region5: #{tpu_custom_call.1} parent=1 // loop_body
      %s15 = ssub.s32 %s10, 1
      %s16 = ssub.s32 %s10, 2
      %s17 = sadd.s32 %s10, 1
      %s18 = ssub.s32 %s10, %s17
      %p19 = scmp.eq.s32.totalorder %s18, 0
      %s21 = sadd.s32 %s20, 1
      %s22 = scalar_select %p19, %s20, %s21
      %p25 = pneg %p19
      %p26 = scmp.eq.s32.totalorder %s10, 1
      %p27 = por %p25, %p26
      %p28 = scmp.ne.s32.totalorder %s20, %s23
      %p29 = scmp.eq.s32.totalorder %s10, 0
      %p30 = por %p28, %p29
      %p31 = scmp.ne.s32.totalorder %s20, %s23
      %p32 = scmp.eq.s32.totalorder %s15, 1
      %p33 = por %p31, %p32
      %p34 = scmp.ne.s32.totalorder %s23, %s24
      %p35 = scmp.eq.s32.totalorder %s15, 0
      %p36 = por %p34, %p35
      %p37 = scmp.ne.s32.totalorder %s23, %s24
      %p38 = scmp.eq.s32.totalorder %s16, 1
      %p39 = por %p37, %p38
      %p41 = scmp.ne.s32.totalorder %s24, %s40
      %p42 = scmp.eq.s32.totalorder %s16, 0
      %p43 = por %p41, %p42
      %s44 = ssub.s32 %s10, %s17
      %p45 = scmp.eq.s32.totalorder %s44, 0
      %s47 = sadd.s32 %s46, 1
      %s48 = scalar_select %p45, %s46, %s47
      %p51 = pneg %p45
      %p52 = scmp.eq.s32.totalorder %s10, 1
      %p53 = por %p51, %p52
      %p54 = scmp.ne.s32.totalorder %s46, %s49
      %p55 = scmp.eq.s32.totalorder %s10, 0
      %p56 = por %p54, %p55
      %p57 = scmp.ne.s32.totalorder %s46, %s49
      %p58 = scmp.eq.s32.totalorder %s15, 1
      %p59 = por %p57, %p58
      %p60 = scmp.ne.s32.totalorder %s49, %s50
      %p61 = scmp.eq.s32.totalorder %s15, 0
      %p62 = por %p60, %p61
      %p63 = scmp.ne.s32.totalorder %s49, %s50
      %p64 = scmp.eq.s32.totalorder %s16, 1
      %p65 = por %p63, %p64
      %p67 = scmp.ne.s32.totalorder %s50, %s66
      %p68 = scmp.eq.s32.totalorder %s16, 0
      %p69 = por %p67, %p68
      %p70 = scmp.le.s32.totalorder 1, %s10
      %p71 = scmp.lt.s32.totalorder %s10, 3
      %p72 = pnand %p70, %p71
      %p73 = pneg %p72
      // Predicated region
      $region9: #{tpu_custom_call.1} parent=5 // pred_check
        _
      $region10: #{tpu_custom_call.1} parent=5 // pred_check_branch
        %75 = sbr.rel (%p72) target = $region12
      $region11: #{tpu_custom_call.1} parent=5 // pred_region
        %s76 = ssub.s32 %s10, 1
      $region12: #{tpu_custom_call.1} parent=5 // pred_fallthru
        _
      %p77 = scmp.lt.s32.totalorder %s10, 2
      // Predicated region
      $region13: #{tpu_custom_call.1} parent=5 // pred_check
        %p78 = pneg %p77
      $region14: #{tpu_custom_call.1} parent=5 // pred_check_branch
        %80 = sbr.rel (%p78) target = $region16
      $region15: #{tpu_custom_call.1} parent=5 // pred_region
        // Predicated region
        $region17: #{tpu_custom_call.1} parent=15 // pred_check
          %p81 = pneg %p30
        $region18: #{tpu_custom_call.1} parent=15 // pred_check_branch
          %83 = sbr.rel (%p81) target = $region20
        $region19: #{tpu_custom_call.1} parent=15 // pred_region
          %s84 = sand.u32 %s20, 1
          %s85 = scalar_lea.sflag [#allocation3], %s84
          %s86 = sand.u32 %s20, 1
          %s87 = smul.addr %s86, 64
          %s88 = scalar_lea.vmem [#allocation2], %s87
          %s90 = ssub.s32 1024, 1024
          %91 = vsyncadd %s85, %s90
          %s92 = smul.addr %s10, 32
          %s93 = smul.addr %s92, 32
          %s94 = scalar_lea.hbm %s0, %s93
          %s95 = sshll.u32 %s88, 4
          %s96 = int_to_ptr.vmem [resolvable:$true] %s95
          %101 = dma.hbm_to_vmem [thread:$0]  %s94, 1024, %s96, %s85, 32, 32, 2
        $region20: #{tpu_custom_call.1} parent=15 // pred_fallthru
          _
      $region16: #{tpu_custom_call.1} parent=5 // pred_fallthru
        _
      %p102 = scmp.le.s32.totalorder 1, %s10
      %p103 = scmp.lt.s32.totalorder %s10, 3
      %p104 = pnand %p102, %p103
      %p105 = pneg %p104
      // Predicated region
      $region21: #{tpu_custom_call.1} parent=5 // pred_check
        _
      $region22: #{tpu_custom_call.1} parent=5 // pred_check_branch
        %107 = sbr.rel (%p104) target = $region24
      $region23: #{tpu_custom_call.1} parent=5 // pred_region
        %s108 = ssub.s32 %s10, 1
        %s109 = sand.u32 %s23, 1
        %s110 = scalar_lea.sflag [#allocation3], %s109
        %s111 = sand.u32 %s23, 1
        %s112 = smul.addr %s111, 64
        %s113 = scalar_lea.vmem [#allocation2], %s112
        // Predicated region
        $region25: #{tpu_custom_call.1} parent=23 // pred_check
          %p114 = pneg %p36
        $region26: #{tpu_custom_call.1} parent=23 // pred_check_branch
          %116 = sbr.rel (%p114) target = $region28
        $region27: #{tpu_custom_call.1} parent=23 // pred_region
          %117 = dma.done %s110, 1024
        $region28: #{tpu_custom_call.1} parent=23 // pred_fallthru
          _
        %s118 = sand.u32 %s23, 1
        %s119 = scalar_lea.sflag [#allocation3], %s118
        %s120 = sand.u32 %s23, 1
        %s121 = smul.addr %s120, 64
        %s122 = scalar_lea.vmem [#allocation2], %s121
        %p123 = pneg %p36
        %p124 = pneg %p33
        %p125 = pneg %p62
        %p126 = pneg %p59
        %p127 = scmp.lt.s32.totalorder %s15, 1
        %s128 = scalar_select %p127, %s15, 1
        %s129 = smul.addr %s128, 96
        %s130 = smul.addr %s129, 8
        %s131 = scalar_lea.vmem %s1, %s130
        %p132 = scmp.lt.s32.totalorder %s15, 1
        %s133 = scalar_select %p132, %s15, 1
        %s134 = smul.addr %s133, 96
        %s135 = smul.addr %s134, 8
        %s136 = scalar_lea.vmem %s1, %s135
        %v137 = vld [vmem:[%s113] sm:$0x3]
        %v138 = vld [vmem:[%s113 + $0x2] sm:$0x3]
        %v139 = vld [vmem:[%s113 + $0x4] sm:$0x3]
        %v140 = vld [vmem:[%s113 + $0x6] sm:$0x3]
        %v141 = vld [vmem:[%s113 + $0x8] sm:$0x3]
        %v142 = vld [vmem:[%s113 + $0xa] sm:$0x3]
        %v143 = vld [vmem:[%s113 + $0xc] sm:$0x3]
        %v144 = vld [vmem:[%s113 + $0xe] sm:$0x3]
        %v145 = vld [vmem:[%s113 + $0x10] sm:$0x3]
        %v146 = vld [vmem:[%s113 + $0x12] sm:$0x3]
        %v147 = vld [vmem:[%s113 + $0x14] sm:$0x3]
        %v148 = vld [vmem:[%s113 + $0x16] sm:$0x3]
        %v149 = vld [vmem:[%s113 + $0x18] sm:$0x3]
        %v150 = vld [vmem:[%s113 + $0x1a] sm:$0x3]
        %v151 = vld [vmem:[%s113 + $0x1c] sm:$0x3]
        %v152 = vld [vmem:[%s113 + $0x1e] sm:$0x3]
        %v153 = vld [vmem:[%s113 + $0x20] sm:$0x3]
        %v154 = vld [vmem:[%s113 + $0x22] sm:$0x3]
        %v155 = vld [vmem:[%s113 + $0x24] sm:$0x3]
        %v156 = vld [vmem:[%s113 + $0x26] sm:$0x3]
        %v157 = vld [vmem:[%s113 + $0x28] sm:$0x3]
        %v158 = vld [vmem:[%s113 + $0x2a] sm:$0x3]
        %v159 = vld [vmem:[%s113 + $0x2c] sm:$0x3]
        %v160 = vld [vmem:[%s113 + $0x2e] sm:$0x3]
        %v161 = vld [vmem:[%s113 + $0x30] sm:$0x3]
        %v162 = vld [vmem:[%s113 + $0x32] sm:$0x3]
        %v163 = vld [vmem:[%s113 + $0x34] sm:$0x3]
        %v164 = vld [vmem:[%s113 + $0x36] sm:$0x3]
        %v165 = vld [vmem:[%s113 + $0x38] sm:$0x3]
        %v166 = vld [vmem:[%s113 + $0x3a] sm:$0x3]
        %v167 = vld [vmem:[%s113 + $0x3c] sm:$0x3]
        %v168 = vld [vmem:[%s113 + $0x3e] sm:$0x1]
        %v169 = vunpack.c.0.s8 %v137
        %v170 = vunpack.c.0.s8 %v138
        %v171 = vunpack.c.0.s8 %v139
        %v172 = vunpack.c.0.s8 %v140
        %v173 = vunpack.c.0.s8 %v141
        %v174 = vunpack.c.0.s8 %v142
        %v175 = vunpack.c.0.s8 %v143
        %v176 = vunpack.c.0.s8 %v144
        %v177 = vunpack.c.0.s8 %v145
        %v178 = vunpack.c.0.s8 %v146
        %v179 = vunpack.c.0.s8 %v147
        %v180 = vunpack.c.0.s8 %v148
        %v181 = vunpack.c.0.s8 %v149
        %v182 = vunpack.c.0.s8 %v150
        %v183 = vunpack.c.0.s8 %v151
        %v184 = vunpack.c.0.s8 %v152
        %v185 = vunpack.c.0.s8 %v153
        %v186 = vunpack.c.0.s8 %v154
        %v187 = vunpack.c.0.s8 %v155
        %v188 = vunpack.c.0.s8 %v156
        %v189 = vunpack.c.0.s8 %v157
        %v190 = vunpack.c.0.s8 %v158
        %v191 = vunpack.c.0.s8 %v159
        %v192 = vunpack.c.0.s8 %v160
        %v193 = vunpack.c.0.s8 %v161
        %v194 = vunpack.c.0.s8 %v162
        %v195 = vunpack.c.0.s8 %v163
        %v196 = vunpack.c.0.s8 %v164
        %v197 = vunpack.c.0.s8 %v165
        %v198 = vunpack.c.0.s8 %v166
        %v199 = vunpack.c.0.s8 %v167
        %v200 = vunpack.c.0.s8 %v168
        %v201 = vcvt.s32.f32 %v169
        %v202 = vcvt.s32.f32 %v170
        %v203 = vcvt.s32.f32 %v171
        %v204 = vcvt.s32.f32 %v172
        %v205 = vcvt.s32.f32 %v173
        %v206 = vcvt.s32.f32 %v174
        %v207 = vcvt.s32.f32 %v175
        %v208 = vcvt.s32.f32 %v176
        %v209 = vcvt.s32.f32 %v177
        %v210 = vcvt.s32.f32 %v178
        %v211 = vcvt.s32.f32 %v179
        %v212 = vcvt.s32.f32 %v180
        %v213 = vcvt.s32.f32 %v181
        %v214 = vcvt.s32.f32 %v182
        %v215 = vcvt.s32.f32 %v183
        %v216 = vcvt.s32.f32 %v184
        %v217 = vcvt.s32.f32 %v185
        %v218 = vcvt.s32.f32 %v186
        %v219 = vcvt.s32.f32 %v187
        %v220 = vcvt.s32.f32 %v188
        %v221 = vcvt.s32.f32 %v189
        %v222 = vcvt.s32.f32 %v190
        %v223 = vcvt.s32.f32 %v191
        %v224 = vcvt.s32.f32 %v192
        %v225 = vcvt.s32.f32 %v193
        %v226 = vcvt.s32.f32 %v194
        %v227 = vcvt.s32.f32 %v195
        %v228 = vcvt.s32.f32 %v196
        %v229 = vcvt.s32.f32 %v197
        %v230 = vcvt.s32.f32 %v198
        %v231 = vcvt.s32.f32 %v199
        %v232 = vcvt.s32.f32 %v200
        %v233 = vmul.f32 %v201, -1.0
        %v234 = vmul.f32 %v202, -1.0
        %v235 = vmul.f32 %v203, -1.0
        %v236 = vmul.f32 %v204, -1.0
        %v237 = vmul.f32 %v205, -1.0
        %v238 = vmul.f32 %v206, -1.0
        %v239 = vmul.f32 %v207, -1.0
        %v240 = vmul.f32 %v208, -1.0
        %v241 = vmul.f32 %v209, -1.0
        %v242 = vmul.f32 %v210, -1.0
        %v243 = vmul.f32 %v211, -1.0
        %v244 = vmul.f32 %v212, -1.0
        %v245 = vmul.f32 %v213, -1.0
        %v246 = vmul.f32 %v214, -1.0
        %v247 = vmul.f32 %v215, -1.0
        %v248 = vmul.f32 %v216, -1.0
        %v249 = vmul.f32 %v217, -1.0
        %v250 = vmul.f32 %v218, -1.0
        %v251 = vmul.f32 %v219, -1.0
        %v252 = vmul.f32 %v220, -1.0
        %v253 = vmul.f32 %v221, -1.0
        %v254 = vmul.f32 %v222, -1.0
        %v255 = vmul.f32 %v223, -1.0
        %v256 = vmul.f32 %v224, -1.0
        %v257 = vmul.f32 %v225, -1.0
        %v258 = vmul.f32 %v226, -1.0
        %v259 = vmul.f32 %v227, -1.0
        %v260 = vmul.f32 %v228, -1.0
        %v261 = vmul.f32 %v229, -1.0
        %v262 = vmul.f32 %v230, -1.0
        %v263 = vmul.f32 %v231, -1.0
        %v264 = vmul.f32 %v232, -1.0
        %v265 = vadd.f32 %v233, 1.0
        %v266 = vadd.f32 %v234, 1.0
        %v267 = vadd.f32 %v235, 1.0
        %v268 = vadd.f32 %v236, 1.0
        %v269 = vadd.f32 %v237, 1.0
        %v270 = vadd.f32 %v238, 1.0
        %v271 = vadd.f32 %v239, 1.0
        %v272 = vadd.f32 %v240, 1.0
        %v273 = vadd.f32 %v241, 1.0
        %v274 = vadd.f32 %v242, 1.0
        %v275 = vadd.f32 %v243, 1.0
        %v276 = vadd.f32 %v244, 1.0
        %v277 = vadd.f32 %v245, 1.0
        %v278 = vadd.f32 %v246, 1.0
        %v279 = vadd.f32 %v247, 1.0
        %v280 = vadd.f32 %v248, 1.0
        %v281 = vadd.f32 %v249, 1.0
        %v282 = vadd.f32 %v250, 1.0
        %v283 = vadd.f32 %v251, 1.0
        %v284 = vadd.f32 %v252, 1.0
        %v285 = vadd.f32 %v253, 1.0
        %v286 = vadd.f32 %v254, 1.0
        %v287 = vadd.f32 %v255, 1.0
        %v288 = vadd.f32 %v256, 1.0
        %v289 = vadd.f32 %v257, 1.0
        %v290 = vadd.f32 %v258, 1.0
        %v291 = vadd.f32 %v259, 1.0
        %v292 = vadd.f32 %v260, 1.0
        %v293 = vadd.f32 %v261, 1.0
        %v294 = vadd.f32 %v262, 1.0
        %v295 = vadd.f32 %v263, 1.0
        %v296 = vadd.f32 %v264, 1.0
        %297 = vst [vmem:[%s136] sm:$0xff] %v265
        %298 = vst [vmem:[%s136 + $0x8] sm:$0xff] %v266
        %299 = vst [vmem:[%s136 + $0x10] sm:$0xff] %v267
        %300 = vst [vmem:[%s136 + $0x18] sm:$0xff] %v268
        %301 = vst [vmem:[%s136 + $0x20] sm:$0xff] %v269
        %302 = vst [vmem:[%s136 + $0x28] sm:$0xff] %v270
        %303 = vst [vmem:[%s136 + $0x30] sm:$0xff] %v271
        %304 = vst [vmem:[%s136 + $0x38] sm:$0xff] %v272
        %305 = vst [vmem:[%s136 + $0x40] sm:$0xff] %v273
        %306 = vst [vmem:[%s136 + $0x48] sm:$0xff] %v274
        %307 = vst [vmem:[%s136 + $0x50] sm:$0xff] %v275
        %308 = vst [vmem:[%s136 + $0x58] sm:$0xff] %v276
        %309 = vst [vmem:[%s136 + $0x60] sm:$0xff] %v277
        %310 = vst [vmem:[%s136 + $0x68] sm:$0xff] %v278
        %311 = vst [vmem:[%s136 + $0x70] sm:$0xff] %v279
        %312 = vst [vmem:[%s136 + $0x78] sm:$0xff] %v280
        %313 = vst [vmem:[%s136 + $0x80] sm:$0xff] %v281
        %314 = vst [vmem:[%s136 + $0x88] sm:$0xff] %v282
        %315 = vst [vmem:[%s136 + $0x90] sm:$0xff] %v283
        %316 = vst [vmem:[%s136 + $0x98] sm:$0xff] %v284
        %317 = vst [vmem:[%s136 + $0xa0] sm:$0xff] %v285
        %318 = vst [vmem:[%s136 + $0xa8] sm:$0xff] %v286
        %319 = vst [vmem:[%s136 + $0xb0] sm:$0xff] %v287
        %320 = vst [vmem:[%s136 + $0xb8] sm:$0xff] %v288
        %321 = vst [vmem:[%s136 + $0xc0] sm:$0xff] %v289
        %322 = vst [vmem:[%s136 + $0xc8] sm:$0xff] %v290
        %323 = vst [vmem:[%s136 + $0xd0] sm:$0xff] %v291
        %324 = vst [vmem:[%s136 + $0xd8] sm:$0xff] %v292
        %325 = vst [vmem:[%s136 + $0xe0] sm:$0xff] %v293
        %326 = vst [vmem:[%s136 + $0xe8] sm:$0xff] %v294
        %327 = vst [vmem:[%s136 + $0xf0] sm:$0xff] %v295
        %328 = vst [vmem:[%s136 + $0xf8] sm:$0x3] %v296
        %s329 = scalar_lea.vmem %s136, 256
        %330 = vst [vmem:[%s329] sm:$0xff] %v265
        %331 = vst [vmem:[%s329 + $0x8] sm:$0xff] %v266
        %332 = vst [vmem:[%s329 + $0x10] sm:$0xff] %v267
        %333 = vst [vmem:[%s329 + $0x18] sm:$0xff] %v268
        %334 = vst [vmem:[%s329 + $0x20] sm:$0xff] %v269
        %335 = vst [vmem:[%s329 + $0x28] sm:$0xff] %v270
        %336 = vst [vmem:[%s329 + $0x30] sm:$0xff] %v271
        %337 = vst [vmem:[%s329 + $0x38] sm:$0xff] %v272
        %338 = vst [vmem:[%s329 + $0x40] sm:$0xff] %v273
        %339 = vst [vmem:[%s329 + $0x48] sm:$0xff] %v274
        %340 = vst [vmem:[%s329 + $0x50] sm:$0xff] %v275
        %341 = vst [vmem:[%s329 + $0x58] sm:$0xff] %v276
        %342 = vst [vmem:[%s329 + $0x60] sm:$0xff] %v277
        %343 = vst [vmem:[%s329 + $0x68] sm:$0xff] %v278
        %344 = vst [vmem:[%s329 + $0x70] sm:$0xff] %v279
        %345 = vst [vmem:[%s329 + $0x78] sm:$0xff] %v280
        %346 = vst [vmem:[%s329 + $0x80] sm:$0xff] %v281
        %347 = vst [vmem:[%s329 + $0x88] sm:$0xff] %v282
        %348 = vst [vmem:[%s329 + $0x90] sm:$0xff] %v283
        %349 = vst [vmem:[%s329 + $0x98] sm:$0xff] %v284
        %350 = vst [vmem:[%s329 + $0xa0] sm:$0xff] %v285
        %351 = vst [vmem:[%s329 + $0xa8] sm:$0xff] %v286
        %352 = vst [vmem:[%s329 + $0xb0] sm:$0xff] %v287
        %353 = vst [vmem:[%s329 + $0xb8] sm:$0xff] %v288
        %354 = vst [vmem:[%s329 + $0xc0] sm:$0xff] %v289
        %355 = vst [vmem:[%s329 + $0xc8] sm:$0xff] %v290
        %356 = vst [vmem:[%s329 + $0xd0] sm:$0xff] %v291
        %357 = vst [vmem:[%s329 + $0xd8] sm:$0xff] %v292
        %358 = vst [vmem:[%s329 + $0xe0] sm:$0xff] %v293
        %359 = vst [vmem:[%s329 + $0xe8] sm:$0xff] %v294
        %360 = vst [vmem:[%s329 + $0xf0] sm:$0xff] %v295
        %361 = vst [vmem:[%s329 + $0xf8] sm:$0x3] %v296
        %s362 = scalar_lea.vmem %s136, 512
        %363 = vst [vmem:[%s362] sm:$0xff] %v265
        %364 = vst [vmem:[%s362 + $0x8] sm:$0xff] %v266
        %365 = vst [vmem:[%s362 + $0x10] sm:$0xff] %v267
        %366 = vst [vmem:[%s362 + $0x18] sm:$0xff] %v268
        %367 = vst [vmem:[%s362 + $0x20] sm:$0xff] %v269
        %368 = vst [vmem:[%s362 + $0x28] sm:$0xff] %v270
        %369 = vst [vmem:[%s362 + $0x30] sm:$0xff] %v271
        %370 = vst [vmem:[%s362 + $0x38] sm:$0xff] %v272
        %371 = vst [vmem:[%s362 + $0x40] sm:$0xff] %v273
        %372 = vst [vmem:[%s362 + $0x48] sm:$0xff] %v274
        %373 = vst [vmem:[%s362 + $0x50] sm:$0xff] %v275
        %374 = vst [vmem:[%s362 + $0x58] sm:$0xff] %v276
        %375 = vst [vmem:[%s362 + $0x60] sm:$0xff] %v277
        %376 = vst [vmem:[%s362 + $0x68] sm:$0xff] %v278
        %377 = vst [vmem:[%s362 + $0x70] sm:$0xff] %v279
        %378 = vst [vmem:[%s362 + $0x78] sm:$0xff] %v280
        %379 = vst [vmem:[%s362 + $0x80] sm:$0xff] %v281
        %380 = vst [vmem:[%s362 + $0x88] sm:$0xff] %v282
        %381 = vst [vmem:[%s362 + $0x90] sm:$0xff] %v283
        %382 = vst [vmem:[%s362 + $0x98] sm:$0xff] %v284
        %383 = vst [vmem:[%s362 + $0xa0] sm:$0xff] %v285
        %384 = vst [vmem:[%s362 + $0xa8] sm:$0xff] %v286
        %385 = vst [vmem:[%s362 + $0xb0] sm:$0xff] %v287
        %386 = vst [vmem:[%s362 + $0xb8] sm:$0xff] %v288
        %387 = vst [vmem:[%s362 + $0xc0] sm:$0xff] %v289
        %388 = vst [vmem:[%s362 + $0xc8] sm:$0xff] %v290
        %389 = vst [vmem:[%s362 + $0xd0] sm:$0xff] %v291
        %390 = vst [vmem:[%s362 + $0xd8] sm:$0xff] %v292
        %391 = vst [vmem:[%s362 + $0xe0] sm:$0xff] %v293
        %392 = vst [vmem:[%s362 + $0xe8] sm:$0xff] %v294
        %393 = vst [vmem:[%s362 + $0xf0] sm:$0xff] %v295
        %394 = vst [vmem:[%s362 + $0xf8] sm:$0x3] %v296
        %p395 = scmp.lt.s32.totalorder %s15, 1
        %s396 = scalar_select %p395, %s15, 1
        %s397 = smul.addr %s396, 96
        %s398 = smul.addr %s397, 8
        %s399 = scalar_lea.vmem %s1, %s398
        // Predicated region
        $region29: #{tpu_custom_call.1} parent=23 // pred_check
          %p400 = pneg %p59
        $region30: #{tpu_custom_call.1} parent=23 // pred_check_branch
          %402 = sbr.rel (%p400) target = $region32
        $region31: #{tpu_custom_call.1} parent=23 // pred_region
          _
        $region32: #{tpu_custom_call.1} parent=23 // pred_fallthru
          _
      $region24: #{tpu_custom_call.1} parent=5 // pred_fallthru
        _
      %p403 = scmp.le.s32.totalorder 2, %s10
      // Predicated region
      $region33: #{tpu_custom_call.1} parent=5 // pred_check
        %p404 = pneg %p403
      $region34: #{tpu_custom_call.1} parent=5 // pred_check_branch
        %406 = sbr.rel (%p404) target = $region36
      $region35: #{tpu_custom_call.1} parent=5 // pred_region
        %s407 = ssub.s32 %s10, 2
        // Predicated region
        $region37: #{tpu_custom_call.1} parent=35 // pred_check
          %p408 = pneg %p65
        $region38: #{tpu_custom_call.1} parent=35 // pred_check_branch
          %410 = sbr.rel (%p408) target = $region40
        $region39: #{tpu_custom_call.1} parent=35 // pred_region
          %p411 = scmp.lt.s32.totalorder %s16, 1
          %s412 = scalar_select %p411, %s16, 1
          %s413 = smul.addr %s412, 96
          %s414 = smul.addr %s413, 8
          %s415 = scalar_lea.vmem %s1, %s414
        $region40: #{tpu_custom_call.1} parent=35 // pred_fallthru
          _
      $region36: #{tpu_custom_call.1} parent=5 // pred_fallthru
        _
    $region6: #{tpu_custom_call.1} parent=1 // loop_footer
      %s14 = sadd.s32 1, %s10
    $region7: #{tpu_custom_call.1} parent=1 // loop_footer_branch
      %9 = sbr.rel target = $region3
    $region8: #{tpu_custom_call.1} parent=1 // loop_exit
      _
    %416 = vsyncpa [#allocation3], 1
    %s417 = scalar_lea.sflag [#allocation3], 1
    %418 = vsyncpa %s417, 1

</llo_original>
